<compile_context>
chip_gen: v7x
topology: tpu7x:2x2x1
jax: 0.10.0
libtpu: 0.0.40
codegen_flags: <defaults>
</compile_context>

<pallas_src>
import jax
import jax.numpy as jnp
from jax.experimental import pallas as pl
from jax.experimental.pallas import tpu as pltpu

NEG_SLOPE = 0.01  # PyTorch LeakyReLU default


def _leaky(h):
    return jnp.where(h >= 0, h, NEG_SLOPE * h)


def _round_up(n, m):
    return ((n + m - 1) // m) * m


def mlp_kernel(x_ref,
               w1_ref, b1_ref,
               w2_ref, b2_ref,
               w3_ref, b3_ref,
               w4_ref, b4_ref,
               out_ref):
    def layer(h, w_ref, b_ref):
        # bf16 operands into the MXU, f32 accumulation; bias add + LeakyReLU in
        # the bias dtype (bf16 on v6e/v7x, f32 on v5e and older).
        z = jnp.dot(w_ref[...], h.astype(w_ref.dtype),
                    preferred_element_type=jnp.float32)
        z = z.astype(b_ref.dtype) + b_ref[...]   # (out, bt) + (out, 1), lane broadcast
        return _leaky(z)

    h = x_ref[...]                                  # (32,  bt)  batch on lanes
    h = layer(h, w1_ref, b1_ref)                    # (256, bt)
    h = layer(h, w2_ref, b2_ref)                    # (64,  bt)
    h = layer(h, w3_ref, b3_ref)                    # (16,  bt)
    g = layer(h, w4_ref, b4_ref).astype(jnp.float32)  # (2, bt) post-LeakyReLU logits

    # softmax over 2 logits == sigmoid of their difference (exact identity);
    # no cross-lane max/sum needed.
    d = g[0:1, :] - g[1:2, :]                       # (1, bt)
    p0 = pl.reciprocal(1.0 + jnp.exp(-d), approx=False)
    out_ref[...] = jnp.concatenate([p0, 1.0 - p0], axis=0).astype(out_ref.dtype)


def mlp_forward(x, params, *, b_tile=1024):
    """x: (B, D) float; params: list of (W (out,in) bf16, b (out,1) act-dtype)."""
    B, D = x.shape
    w_dtype = params[0][0].dtype

    # Tile sizing: lanes need 128-alignment; balance tiles so padding waste is
    # bounded per tile; force >=2 tiles once B >= 256 so v7x's second
    # TensorCore is used (batch axis is "parallel").
    b_min = _round_up(B, 128)
    n_tiles = max(pl.cdiv(b_min, b_tile), 2 if b_min >= 256 else 1)
    bt = _round_up(pl.cdiv(b_min, n_tiles), 128)
    n_tiles = pl.cdiv(b_min, bt)
    b_pad = n_tiles * bt

    # Producer-side transpose + bf16 cast in one XLA op: (B, D) -> (D, B).
    x_t = jnp.transpose(x).astype(w_dtype)
    if b_pad != B:
        x_t = jnp.pad(x_t, ((0, 0), (0, b_pad - B)))

    flat = [x_t]
    in_specs = [pl.BlockSpec((D, bt), lambda i: (0, i))]  # batch-tiled input
    for w, b in params:
        # Full-extent blocks; constant index_map keeps them VMEM-resident
        # across all batch tiles (no per-step re-DMA of weights).
        in_specs.append(pl.BlockSpec(w.shape, lambda i: (0, 0)))
        in_specs.append(pl.BlockSpec(b.shape, lambda i: (0, 0)))
        flat += [w, b]

    out = pl.pallas_call(
        mlp_kernel,
        out_shape=jax.ShapeDtypeStruct((2, b_pad), jnp.float32),
        grid=(n_tiles,),
        in_specs=in_specs,
        out_specs=pl.BlockSpec((2, bt), lambda i: (0, i)),  # lane-dense output
        compiler_params=pltpu.CompilerParams(
            dimension_semantics=("parallel",)),  # shard batch tiles on v7x's 2 TCs
    )(*flat)
    return out[:, :B].T  # (B, 2)


def init_linear(key, fan_in, fan_out, b_dtype):
    """Deterministic PyTorch-style Linear init: U(-1/sqrt(fan_in), 1/sqrt(fan_in)).

    Weights are stored PyTorch-style as (out_features, in_features) in bf16;
    biases as (out_features, 1) in the activation dtype.
    """
    kw, kb = jax.random.split(key)
    bound = 1.0 / (fan_in ** 0.5)
    w = jax.random.uniform(kw, (fan_out, fan_in), jnp.float32, -bound, bound)
    b = jax.random.uniform(kb, (fan_out, 1), jnp.float32, -bound, bound)
    return w.astype(jnp.bfloat16), b.astype(b_dtype)


def reference_forward(x, params):
    """Pure-JAX reference mirroring the kernel's dtypes (bf16 MXU operands,
    f32 accumulation, bias/LeakyReLU in the bias dtype, softmax == sigmoid fold)."""
    h = x.astype(params[0][0].dtype)  # producer-side bf16 cast, as in mlp_forward
    for w, b in params:
        z = jnp.dot(h.astype(w.dtype), w.T, preferred_element_type=jnp.float32)
        z = z.astype(b.dtype) + b[:, 0]
        h = _leaky(z)
    return jax.nn.softmax(h.astype(jnp.float32), axis=-1)


if __name__ == "__main__":
    key = jax.random.PRNGKey(0)
    k_x, k1, k2, k3, k4 = jax.random.split(key, 5)

    input_variable_num = 32
    batch = 8

    # bf16 elementwise only where the VPU supports it (v6e / v7x and newer);
    # keep f32 elementwise on v5e and older.
    kind = jax.devices()[0].device_kind.lower()
    act_dtype = jnp.float32 if any(
        t in kind for t in ("v2", "v3", "v4", "v5")) else jnp.bfloat16

    x = jax.random.normal(k_x, (batch, input_variable_num), jnp.float32)

    dims = [input_variable_num, 256, 64, 16, 2]
    keys = [k1, k2, k3, k4]
    params = [init_linear(k, dims[i], dims[i + 1], act_dtype)
              for i, k in enumerate(keys)]

    out = jax.block_until_ready(mlp_forward(x, params))
    ref = reference_forward(x, params)

    assert out.shape == (batch, 2)
    # Reference mirrors the kernel's bf16 math; remaining diffs are MXU/XLA
    # accumulation-order level.
    assert jnp.allclose(out, ref, atol=5e-3, rtol=5e-3), "mismatch vs pure-JAX reference"
    # p1 = 1 - p0, so rows sum to 1 (up to f32 rounding).
    assert jnp.allclose(jnp.sum(out, axis=-1), 1.0, atol=1e-5), "rows do not sum to 1"

    print("KERNEL_OK")
</pallas_src>

<mosaic_0001>
module attributes {stable_mosaic.version = 11 : i64} {
  func.func @mlp_kernel(%arg0: i32, %arg1: memref<32x128xbf16, #tpu.memory_space<vmem>>, %arg2: memref<256x32xbf16, #tpu.memory_space<vmem>>, %arg3: memref<256x1xbf16, #tpu.memory_space<vmem>>, %arg4: memref<64x256xbf16, #tpu.memory_space<vmem>>, %arg5: memref<64x1xbf16, #tpu.memory_space<vmem>>, %arg6: memref<16x64xbf16, #tpu.memory_space<vmem>>, %arg7: memref<16x1xbf16, #tpu.memory_space<vmem>>, %arg8: memref<2x16xbf16, #tpu.memory_space<vmem>>, %arg9: memref<2x1xbf16, #tpu.memory_space<vmem>>, %arg10: memref<2x128xf32, #tpu.memory_space<vmem>>) attributes {dimension_semantics = [#tpu.dimension_semantics<parallel>], iteration_bounds = array<i64: 1>, scalar_prefetch = 0 : i64, scratch_operands = 0 : i64, tpu.core_type = #tpu.core_type<tc>, window_params = [{transform_indices = @transform_0, window_bounds = array<i64: 32, 128>}, {pipeline_mode = #tpu.pipeline_mode<synchronous>, transform_indices = @transform_1, window_bounds = array<i64: 256, 32>}, {pipeline_mode = #tpu.pipeline_mode<synchronous>, transform_indices = @transform_2, window_bounds = array<i64: 256, 1>}, {pipeline_mode = #tpu.pipeline_mode<synchronous>, transform_indices = @transform_3, window_bounds = array<i64: 64, 256>}, {pipeline_mode = #tpu.pipeline_mode<synchronous>, transform_indices = @transform_4, window_bounds = array<i64: 64, 1>}, {pipeline_mode = #tpu.pipeline_mode<synchronous>, transform_indices = @transform_5, window_bounds = array<i64: 16, 64>}, {pipeline_mode = #tpu.pipeline_mode<synchronous>, transform_indices = @transform_6, window_bounds = array<i64: 16, 1>}, {pipeline_mode = #tpu.pipeline_mode<synchronous>, transform_indices = @transform_7, window_bounds = array<i64: 2, 16>}, {pipeline_mode = #tpu.pipeline_mode<synchronous>, transform_indices = @transform_8, window_bounds = array<i64: 2, 1>}, {transform_indices = @transform_9, window_bounds = array<i64: 2, 128>}]} {
    %c0 = arith.constant 0 : index
    %c0_0 = arith.constant 0 : index
    %0 = vector.load %arg1[%c0, %c0_0] : memref<32x128xbf16, #tpu.memory_space<vmem>>, vector<32x128xbf16>
    %c0_1 = arith.constant 0 : index
    %c0_2 = arith.constant 0 : index
    %1 = vector.load %arg2[%c0_1, %c0_2] : memref<256x32xbf16, #tpu.memory_space<vmem>>, vector<256x32xbf16>
    %cst = arith.constant dense<0.000000e+00> : vector<256x128xf32>
    %2 = tpu.matmul %1, %0, %cst {dimension_numbers = #tpu.dot_dimension_numbers<[1], [0], [0], [1], [0, 0, 1, 1], [], []>} : vector<256x32xbf16>, vector<32x128xbf16>, vector<256x128xf32> -> vector<256x128xf32>
    %3 = arith.truncf %2 : vector<256x128xf32> to vector<256x128xbf16>
    %c0_3 = arith.constant 0 : index
    %c0_4 = arith.constant 0 : index
    %4 = vector.load %arg3[%c0_3, %c0_4] : memref<256x1xbf16, #tpu.memory_space<vmem>>, vector<256x1xbf16>
    %5 = vector.broadcast %4 : vector<256x1xbf16> to vector<256x128xbf16>
    %6 = arith.addf %3, %5 : vector<256x128xbf16>
    %cst_5 = arith.constant 0.000000e+00 : bf16
    %7 = vector.broadcast %cst_5 : bf16 to vector<256x128xbf16>
    %8 = arith.cmpf oge, %6, %7 : vector<256x128xbf16>
    %cst_6 = arith.constant 1.000980e-02 : bf16
    %9 = vector.broadcast %cst_6 : bf16 to vector<256x128xbf16>
    %10 = arith.mulf %9, %6 : vector<256x128xbf16>
    %11 = arith.select %8, %6, %10 : vector<256x128xi1>, vector<256x128xbf16>
    %c0_7 = arith.constant 0 : index
    %c0_8 = arith.constant 0 : index
    %12 = vector.load %arg4[%c0_7, %c0_8] : memref<64x256xbf16, #tpu.memory_space<vmem>>, vector<64x256xbf16>
    %cst_9 = arith.constant dense<0.000000e+00> : vector<64x128xf32>
    %13 = tpu.matmul %12, %11, %cst_9 {dimension_numbers = #tpu.dot_dimension_numbers<[1], [0], [0], [1], [0, 0, 1, 1], [], []>} : vector<64x256xbf16>, vector<256x128xbf16>, vector<64x128xf32> -> vector<64x128xf32>
    %14 = arith.truncf %13 : vector<64x128xf32> to vector<64x128xbf16>
    %c0_10 = arith.constant 0 : index
    %c0_11 = arith.constant 0 : index
    %15 = vector.load %arg5[%c0_10, %c0_11] : memref<64x1xbf16, #tpu.memory_space<vmem>>, vector<64x1xbf16>
    %16 = vector.broadcast %15 : vector<64x1xbf16> to vector<64x128xbf16>
    %17 = arith.addf %14, %16 : vector<64x128xbf16>
    %cst_12 = arith.constant 0.000000e+00 : bf16
    %18 = vector.broadcast %cst_12 : bf16 to vector<64x128xbf16>
    %19 = arith.cmpf oge, %17, %18 : vector<64x128xbf16>
    %cst_13 = arith.constant 1.000980e-02 : bf16
    %20 = vector.broadcast %cst_13 : bf16 to vector<64x128xbf16>
    %21 = arith.mulf %20, %17 : vector<64x128xbf16>
    %22 = arith.select %19, %17, %21 : vector<64x128xi1>, vector<64x128xbf16>
    %c0_14 = arith.constant 0 : index
    %c0_15 = arith.constant 0 : index
    %23 = vector.load %arg6[%c0_14, %c0_15] : memref<16x64xbf16, #tpu.memory_space<vmem>>, vector<16x64xbf16>
    %cst_16 = arith.constant dense<0.000000e+00> : vector<16x128xf32>
    %24 = tpu.matmul %23, %22, %cst_16 {dimension_numbers = #tpu.dot_dimension_numbers<[1], [0], [0], [1], [0, 0, 1, 1], [], []>} : vector<16x64xbf16>, vector<64x128xbf16>, vector<16x128xf32> -> vector<16x128xf32>
    %25 = arith.truncf %24 : vector<16x128xf32> to vector<16x128xbf16>
    %c0_17 = arith.constant 0 : index
    %c0_18 = arith.constant 0 : index
    %26 = vector.load %arg7[%c0_17, %c0_18] : memref<16x1xbf16, #tpu.memory_space<vmem>>, vector<16x1xbf16>
    %27 = vector.broadcast %26 : vector<16x1xbf16> to vector<16x128xbf16>
    %28 = arith.addf %25, %27 : vector<16x128xbf16>
    %cst_19 = arith.constant 0.000000e+00 : bf16
    %29 = vector.broadcast %cst_19 : bf16 to vector<16x128xbf16>
    %30 = arith.cmpf oge, %28, %29 : vector<16x128xbf16>
    %cst_20 = arith.constant 1.000980e-02 : bf16
    %31 = vector.broadcast %cst_20 : bf16 to vector<16x128xbf16>
    %32 = arith.mulf %31, %28 : vector<16x128xbf16>
    %33 = arith.select %30, %28, %32 : vector<16x128xi1>, vector<16x128xbf16>
    %c0_21 = arith.constant 0 : index
    %c0_22 = arith.constant 0 : index
    %34 = vector.load %arg8[%c0_21, %c0_22] : memref<2x16xbf16, #tpu.memory_space<vmem>>, vector<2x16xbf16>
    %cst_23 = arith.constant dense<0.000000e+00> : vector<2x128xf32>
    %35 = tpu.matmul %34, %33, %cst_23 {dimension_numbers = #tpu.dot_dimension_numbers<[1], [0], [0], [1], [0, 0, 1, 1], [], []>} : vector<2x16xbf16>, vector<16x128xbf16>, vector<2x128xf32> -> vector<2x128xf32>
    %36 = arith.truncf %35 : vector<2x128xf32> to vector<2x128xbf16>
    %c0_24 = arith.constant 0 : index
    %c0_25 = arith.constant 0 : index
    %37 = vector.load %arg9[%c0_24, %c0_25] : memref<2x1xbf16, #tpu.memory_space<vmem>>, vector<2x1xbf16>
    %38 = vector.broadcast %37 : vector<2x1xbf16> to vector<2x128xbf16>
    %39 = arith.addf %36, %38 : vector<2x128xbf16>
    %cst_26 = arith.constant 0.000000e+00 : bf16
    %40 = vector.broadcast %cst_26 : bf16 to vector<2x128xbf16>
    %41 = arith.cmpf oge, %39, %40 : vector<2x128xbf16>
    %cst_27 = arith.constant 1.000980e-02 : bf16
    %42 = vector.broadcast %cst_27 : bf16 to vector<2x128xbf16>
    %43 = arith.mulf %42, %39 : vector<2x128xbf16>
    %44 = arith.select %41, %39, %43 : vector<2x128xi1>, vector<2x128xbf16>
    %45 = arith.extf %44 : vector<2x128xbf16> to vector<2x128xf32>
    %46 = vector.extract_strided_slice %45 {offsets = [0, 0], sizes = [1, 128], strides = [1, 1]} : vector<2x128xf32> to vector<1x128xf32>
    %47 = vector.extract_strided_slice %45 {offsets = [1, 0], sizes = [1, 128], strides = [1, 1]} : vector<2x128xf32> to vector<1x128xf32>
    %48 = arith.subf %46, %47 : vector<1x128xf32>
    %cst_28 = arith.constant 0.000000e+00 : f32
    %49 = vector.broadcast %cst_28 : f32 to vector<1x128xf32>
    %50 = arith.subf %49, %48 : vector<1x128xf32>
    %51 = math.exp %50 : vector<1x128xf32>
    %cst_29 = arith.constant 1.000000e+00 : f32
    %52 = vector.broadcast %cst_29 : f32 to vector<1x128xf32>
    %53 = arith.addf %52, %51 : vector<1x128xf32>
    %54 = tpu.reciprocal %53 : vector<1x128xf32> -> vector<1x128xf32>
    %cst_30 = arith.constant 1.000000e+00 : f32
    %55 = vector.broadcast %cst_30 : f32 to vector<1x128xf32>
    %56 = arith.subf %55, %54 : vector<1x128xf32>
    %57 = tpu.concatenate %54, %56 in 0 : vector<1x128xf32>, vector<1x128xf32> -> vector<2x128xf32>
    %c0_31 = arith.constant 0 : index
    %c0_32 = arith.constant 0 : index
    %58 = vector.load %arg10[%c0_31, %c0_32] : memref<2x128xf32, #tpu.memory_space<vmem>>, vector<2x128xf32>
    tpu.vector_store %arg10[%c0_31, %c0_32], %57 {strides = array<i32>} : memref<2x128xf32, #tpu.memory_space<vmem>>, vector<2x128xf32>,
    return
  }
  func.func @transform_0(%arg0: i32) -> (i32, i32) {
    %c0_i32 = arith.constant 0 : i32
    %c0_i32_0 = arith.constant 0 : i32
    return %c0_i32, %arg0 : i32, i32
  }
  func.func @transform_1(%arg0: i32) -> (i32, i32) {
    %c0_i32 = arith.constant 0 : i32
    %c0_i32_0 = arith.constant 0 : i32
    %c0_i32_1 = arith.constant 0 : i32
    return %c0_i32, %c0_i32_0 : i32, i32
  }
  func.func @transform_2(%arg0: i32) -> (i32, i32) {
    %c0_i32 = arith.constant 0 : i32
    %c0_i32_0 = arith.constant 0 : i32
    %c0_i32_1 = arith.constant 0 : i32
    return %c0_i32, %c0_i32_0 : i32, i32
  }
  func.func @transform_3(%arg0: i32) -> (i32, i32) {
    %c0_i32 = arith.constant 0 : i32
    %c0_i32_0 = arith.constant 0 : i32
    %c0_i32_1 = arith.constant 0 : i32
    return %c0_i32, %c0_i32_0 : i32, i32
  }
  func.func @transform_4(%arg0: i32) -> (i32, i32) {
    %c0_i32 = arith.constant 0 : i32
    %c0_i32_0 = arith.constant 0 : i32
    %c0_i32_1 = arith.constant 0 : i32
    return %c0_i32, %c0_i32_0 : i32, i32
  }
  func.func @transform_5(%arg0: i32) -> (i32, i32) {
    %c0_i32 = arith.constant 0 : i32
    %c0_i32_0 = arith.constant 0 : i32
    %c0_i32_1 = arith.constant 0 : i32
    return %c0_i32, %c0_i32_0 : i32, i32
  }
  func.func @transform_6(%arg0: i32) -> (i32, i32) {
    %c0_i32 = arith.constant 0 : i32
    %c0_i32_0 = arith.constant 0 : i32
    %c0_i32_1 = arith.constant 0 : i32
    return %c0_i32, %c0_i32_0 : i32, i32
  }
  func.func @transform_7(%arg0: i32) -> (i32, i32) {
    %c0_i32 = arith.constant 0 : i32
    %c0_i32_0 = arith.constant 0 : i32
    %c0_i32_1 = arith.constant 0 : i32
    return %c0_i32, %c0_i32_0 : i32, i32
  }
  func.func @transform_8(%arg0: i32) -> (i32, i32) {
    %c0_i32 = arith.constant 0 : i32
    %c0_i32_0 = arith.constant 0 : i32
    %c0_i32_1 = arith.constant 0 : i32
    return %c0_i32, %c0_i32_0 : i32, i32
  }
  func.func @transform_9(%arg0: i32) -> (i32, i32) {
    %c0_i32 = arith.constant 0 : i32
    %c0_i32_0 = arith.constant 0 : i32
    return %c0_i32, %arg0 : i32, i32
  }
}

</mosaic_0001>

<llo_original>
// kernel: tpu_custom_call.1
$region0: #{tpu_custom_call.1}
  #allocation0 [shape = 'u32[]', space=smem, size = 0x4, offset = 0x4, fixed_abs, tag = 'smem constant byte address 0x4 - core index']
  #allocation1 [shape = 'u32[144,128]{1,0:T(1,128)}', space=vmem, size = 0x12000, scoped, tag = 'internal scratch']
  %s0 = inlined_call_operand.vmem [shape: bf16[32,128], index: 0, kind: input, shape index: {}]
  %s1 = inlined_call_operand.vmem [shape: bf16[256,32], index: 1, kind: input, shape index: {}]
  %s2 = inlined_call_operand.vmem [shape: bf16[256,1], index: 2, kind: input, shape index: {}]
  %s3 = inlined_call_operand.vmem [shape: bf16[64,256], index: 3, kind: input, shape index: {}]
  %s4 = inlined_call_operand.vmem [shape: bf16[64,1], index: 4, kind: input, shape index: {}]
  %s5 = inlined_call_operand.vmem [shape: bf16[16,64], index: 5, kind: input, shape index: {}]
  %s6 = inlined_call_operand.vmem [shape: bf16[16,1], index: 6, kind: input, shape index: {}]
  %s7 = inlined_call_operand.vmem [shape: bf16[2,16], index: 7, kind: input, shape index: {}]
  %s8 = inlined_call_operand.vmem [shape: bf16[2,1], index: 8, kind: input, shape index: {}]
  %s9 = inlined_call_operand.hbm [shape: f32[2,128], index: 9, kind: output, shape index: {}]
  %s10 = sld [smem:[#allocation0]]
  $region46: #{tpu_custom_call.1} parent=0
    _
  %s12 = ssub.s32 1, %s10
  %s13 = scalar_select 0, %s12, %s10
  $region1: #{tpu_custom_call.1} parent=0
    #allocation2 [shape = 'u8[1024]{0}', space=vmem, size = 0x400, scoped, tag = 'output window, operand 0, single buffered']
    #allocation3 [shape = 's32[1]{0}', space=sflag, size = 0x4, scoped, tag = 'scoped memory for tpu_custom_call.1']
    %14 = vsyncpa [#allocation3], 0
    // Predicated region
    $region2: #{tpu_custom_call.1} parent=1 // pred_check
      _
    $region3: #{tpu_custom_call.1} parent=1 // pred_check_branch
      %16 = sbr.rel (0) target = $region5
    $region4: #{tpu_custom_call.1} parent=1 // pred_region
      _
    $region5: #{tpu_custom_call.1} parent=1 // pred_fallthru
      _
    // Predicated region
    $region6: #{tpu_custom_call.1} parent=1 // pred_check
      _
    $region7: #{tpu_custom_call.1} parent=1 // pred_check_branch
      %18 = sbr.rel (0) target = $region9
    $region8: #{tpu_custom_call.1} parent=1 // pred_region
      _
    $region9: #{tpu_custom_call.1} parent=1 // pred_fallthru
      _
    // Predicated region
    $region10: #{tpu_custom_call.1} parent=1 // pred_check
      _
    $region11: #{tpu_custom_call.1} parent=1 // pred_check_branch
      %20 = sbr.rel (0) target = $region13
    $region12: #{tpu_custom_call.1} parent=1 // pred_region
      _
    $region13: #{tpu_custom_call.1} parent=1 // pred_fallthru
      _
    // Predicated region
    $region14: #{tpu_custom_call.1} parent=1 // pred_check
      _
    $region15: #{tpu_custom_call.1} parent=1 // pred_check_branch
      %22 = sbr.rel (0) target = $region17
    $region16: #{tpu_custom_call.1} parent=1 // pred_region
      _
    $region17: #{tpu_custom_call.1} parent=1 // pred_fallthru
      _
    // Predicated region
    $region18: #{tpu_custom_call.1} parent=1 // pred_check
      _
    $region19: #{tpu_custom_call.1} parent=1 // pred_check_branch
      %24 = sbr.rel (0) target = $region21
    $region20: #{tpu_custom_call.1} parent=1 // pred_region
      _
    $region21: #{tpu_custom_call.1} parent=1 // pred_fallthru
      _
    // Predicated region
    $region22: #{tpu_custom_call.1} parent=1 // pred_check
      _
    $region23: #{tpu_custom_call.1} parent=1 // pred_check_branch
      %26 = sbr.rel (0) target = $region25
    $region24: #{tpu_custom_call.1} parent=1 // pred_region
      _
    $region25: #{tpu_custom_call.1} parent=1 // pred_fallthru
      _
    // Predicated region
    $region26: #{tpu_custom_call.1} parent=1 // pred_check
      _
    $region27: #{tpu_custom_call.1} parent=1 // pred_check_branch
      %28 = sbr.rel (0) target = $region29
    $region28: #{tpu_custom_call.1} parent=1 // pred_region
      _
    $region29: #{tpu_custom_call.1} parent=1 // pred_fallthru
      _
    // Predicated region
    $region30: #{tpu_custom_call.1} parent=1 // pred_check
      _
    $region31: #{tpu_custom_call.1} parent=1 // pred_check_branch
      %30 = sbr.rel (0) target = $region33
    $region32: #{tpu_custom_call.1} parent=1 // pred_region
      _
    $region33: #{tpu_custom_call.1} parent=1 // pred_fallthru
      _
    // Predicated region
    $region34: #{tpu_custom_call.1} parent=1 // pred_check
      _
    $region35: #{tpu_custom_call.1} parent=1 // pred_check_branch
      %32 = sbr.rel (0) target = $region37
    $region36: #{tpu_custom_call.1} parent=1 // pred_region
      _
    $region37: #{tpu_custom_call.1} parent=1 // pred_fallthru
      _
    %v35 = vld [vmem:[%s0] sm:$0xf]
    %v36 = vld [vmem:[%s0 + $0x4] sm:$0xf]
    %v37 = vld [vmem:[%s0 + $0x8] sm:$0xf]
    %v38 = vld [vmem:[%s0 + $0xc] sm:$0xf]
    %v39 = vld [vmem:[%s1] sm:$0xf]
    %v40 = vld [vmem:[%s1 + $0x4] sm:$0xf]
    %v41 = vld [vmem:[%s1 + $0x8] sm:$0xf]
    %v42 = vld [vmem:[%s1 + $0xc] sm:$0xf]
    %v43 = vld [vmem:[%s1 + $0x10] sm:$0xf]
    %v44 = vld [vmem:[%s1 + $0x14] sm:$0xf]
    %v45 = vld [vmem:[%s1 + $0x18] sm:$0xf]
    %v46 = vld [vmem:[%s1 + $0x1c] sm:$0xf]
    %v47 = vld [vmem:[%s1 + $0x20] sm:$0xf]
    %v48 = vld [vmem:[%s1 + $0x24] sm:$0xf]
    %v49 = vld [vmem:[%s1 + $0x28] sm:$0xf]
    %v50 = vld [vmem:[%s1 + $0x2c] sm:$0xf]
    %v51 = vld [vmem:[%s1 + $0x30] sm:$0xf]
    %v52 = vld [vmem:[%s1 + $0x34] sm:$0xf]
    %v53 = vld [vmem:[%s1 + $0x38] sm:$0xf]
    %v54 = vld [vmem:[%s1 + $0x3c] sm:$0xf]
    %v55 = vld [vmem:[%s1 + $0x40] sm:$0xf]
    %v56 = vld [vmem:[%s1 + $0x44] sm:$0xf]
    %v57 = vld [vmem:[%s1 + $0x48] sm:$0xf]
    %v58 = vld [vmem:[%s1 + $0x4c] sm:$0xf]
    %v59 = vld [vmem:[%s1 + $0x50] sm:$0xf]
    %v60 = vld [vmem:[%s1 + $0x54] sm:$0xf]
    %v61 = vld [vmem:[%s1 + $0x58] sm:$0xf]
    %v62 = vld [vmem:[%s1 + $0x5c] sm:$0xf]
    %v63 = vld [vmem:[%s1 + $0x60] sm:$0xf]
    %v64 = vld [vmem:[%s1 + $0x64] sm:$0xf]
    %v65 = vld [vmem:[%s1 + $0x68] sm:$0xf]
    %v66 = vld [vmem:[%s1 + $0x6c] sm:$0xf]
    %v67 = vld [vmem:[%s1 + $0x70] sm:$0xf]
    %v68 = vld [vmem:[%s1 + $0x74] sm:$0xf]
    %v69 = vld [vmem:[%s1 + $0x78] sm:$0xf]
    %v70 = vld [vmem:[%s1 + $0x7c] sm:$0xf]
    %v103 = vunpack.c.l.b16 %v39
    %v104 = vunpack.c.l.b16 %v40
    %v105 = vunpack.c.l.b16 %v41
    %v106 = vunpack.c.l.b16 %v42
    %v107 = vunpack.c.l.b16 %v43
    %v108 = vunpack.c.l.b16 %v44
    %v109 = vunpack.c.l.b16 %v45
    %v110 = vunpack.c.l.b16 %v46
    %v111 = vunpack.c.l.b16 %v47
    %v112 = vunpack.c.l.b16 %v48
    %v113 = vunpack.c.l.b16 %v49
    %v114 = vunpack.c.l.b16 %v50
    %v115 = vunpack.c.l.b16 %v51
    %v116 = vunpack.c.l.b16 %v52
    %v117 = vunpack.c.l.b16 %v53
    %v118 = vunpack.c.l.b16 %v54
    %v119 = vunpack.c.l.b16 %v55
    %v120 = vunpack.c.l.b16 %v56
    %v121 = vunpack.c.l.b16 %v57
    %v122 = vunpack.c.l.b16 %v58
    %v123 = vunpack.c.l.b16 %v59
    %v124 = vunpack.c.l.b16 %v60
    %v125 = vunpack.c.l.b16 %v61
    %v126 = vunpack.c.l.b16 %v62
    %v127 = vunpack.c.l.b16 %v63
    %v128 = vunpack.c.l.b16 %v64
    %v129 = vunpack.c.l.b16 %v65
    %v130 = vunpack.c.l.b16 %v66
    %v131 = vunpack.c.l.b16 %v67
    %v132 = vunpack.c.l.b16 %v68
    %v133 = vunpack.c.l.b16 %v69
    %v134 = vunpack.c.l.b16 %v70
    %v135 = vpack.c.b16 %v104, %v103
    %v136 = vpack.c.b16 %v106, %v105
    %v137 = vpack.c.b16 %v108, %v107
    %v138 = vpack.c.b16 %v110, %v109
    %v139 = vpack.c.b16 %v112, %v111
    %v140 = vpack.c.b16 %v114, %v113
    %v141 = vpack.c.b16 %v116, %v115
    %v142 = vpack.c.b16 %v118, %v117
    %v143 = vpack.c.b16 %v120, %v119
    %v144 = vpack.c.b16 %v122, %v121
    %v145 = vpack.c.b16 %v124, %v123
    %v146 = vpack.c.b16 %v126, %v125
    %v147 = vpack.c.b16 %v128, %v127
    %v148 = vpack.c.b16 %v130, %v129
    %v149 = vpack.c.b16 %v132, %v131
    %v150 = vpack.c.b16 %v134, %v133
    %v155 = vunpack.c.l.b16 %v35
    %v156 = vunpack.c.l.b16 %v36
    %v157 = vunpack.c.l.b16 %v37
    %v158 = vunpack.c.l.b16 %v38
    %v159 = vpack.c.b16 %v156, %v155
    %v160 = vpack.c.b16 %v158, %v157
    %vm163 = vcmask 261120
    %v165 = vsel %vm163, %v135, 0
    %v168 = vsel %vm163, %v136, 0
    %v171 = vsel %vm163, %v137, 0
    %v174 = vsel %vm163, %v138, 0
    %v177 = vsel %vm163, %v139, 0
    %v180 = vsel %vm163, %v140, 0
    %v183 = vsel %vm163, %v141, 0
    %v186 = vsel %vm163, %v142, 0
    %v189 = vsel %vm163, %v143, 0
    %v192 = vsel %vm163, %v144, 0
    %v195 = vsel %vm163, %v145, 0
    %v198 = vsel %vm163, %v146, 0
    %v201 = vsel %vm163, %v147, 0
    %v204 = vsel %vm163, %v148, 0
    %v207 = vsel %vm163, %v149, 0
    %v210 = vsel %vm163, %v150, 0
    %212 = vmatprep.subr.bf16.mxu0 0
    %213 = vmatpush1.bf16.msra.mxu0 %v159
    %214 = vmatprep.subr.bf16.mxu0 0
    %215 = vmatpush1.bf16.msra.mxu0 %v160
    %216 = vmatprep.subr.bf16.mxu0 0
    %217 = vmatpush1.bf16.msra.mxu0 0
    %218 = vmatprep.subr.bf16.mxu0 0
    %219 = vmatpush1.bf16.msra.mxu0 0
    %220 = vmatprep.subr.bf16.mxu0 0
    %221 = vmatpush1.bf16.msra.mxu0 0
    %222 = vmatprep.subr.bf16.mxu0 0
    %223 = vmatpush1.bf16.msra.mxu0 0
    %224 = vmatprep.subr.bf16.mxu0 0
    %225 = vmatpush1.bf16.msra.mxu0 0
    %226 = vmatprep.subr.bf16.mxu0 0
    %227 = vmatpush1.bf16.msra.mxu0 0
    %228 = vmatprep.subr.bf16.mxu0 0
    %229 = vmatpush1.bf16.msra.mxu0 0
    %230 = vmatprep.subr.bf16.mxu0 0
    %231 = vmatpush1.bf16.msra.mxu0 0
    %232 = vmatprep.subr.bf16.mxu0 0
    %233 = vmatpush1.bf16.msra.mxu0 0
    %234 = vmatprep.subr.bf16.mxu0 0
    %235 = vmatpush1.bf16.msra.mxu0 0
    %236 = vmatprep.subr.bf16.mxu0 0
    %237 = vmatpush1.bf16.msra.mxu0 0
    %238 = vmatprep.subr.bf16.mxu0 0
    %239 = vmatpush1.bf16.msra.mxu0 0
    %240 = vmatprep.subr.bf16.mxu0 0
    %241 = vmatpush1.bf16.msra.mxu0 0
    %242 = vmatprep.subr.bf16.mxu0 0
    %243 = vmatpush1.bf16.msra.mxu0 0
    %244 = vmatprep.mubr.bf16.mxu0 0
    %245 = vmatmul.mubr.bf16.gmra.mrb[0].mxu0 %v165
    %v246 = vpop.f32.mrb[0].mxu0
    %v247 = vadd.f32 0.0, %v246
    %v248 = vpop.f32.mrb[0].mxu0
    %v249 = vpop.f32.mrb[0].mxu0
    %v250 = vadd.f32 0.0, %v249
    %v251 = vpop.f32.mrb[0].mxu0
    %252 = vmatprep.mubr.bf16.mxu0 0
    %253 = vmatmul.mubr.bf16.gmra.mrb[0].mxu0 %v168
    %v254 = vpop.f32.mrb[0].mxu0
    %v255 = vadd.f32 0.0, %v254
    %v256 = vpop.f32.mrb[0].mxu0
    %v257 = vpop.f32.mrb[0].mxu0
    %v258 = vadd.f32 0.0, %v257
    %v259 = vpop.f32.mrb[0].mxu0
    %260 = vmatprep.mubr.bf16.mxu0 0
    %261 = vmatmul.mubr.bf16.gmra.mrb[0].mxu0 %v171
    %v262 = vpop.f32.mrb[0].mxu0
    %v263 = vadd.f32 0.0, %v262
    %v264 = vpop.f32.mrb[0].mxu0
    %v265 = vpop.f32.mrb[0].mxu0
    %v266 = vadd.f32 0.0, %v265
    %v267 = vpop.f32.mrb[0].mxu0
    %268 = vmatprep.mubr.bf16.mxu0 0
    %269 = vmatmul.mubr.bf16.gmra.mrb[0].mxu0 %v174
    %v270 = vpop.f32.mrb[0].mxu0
    %v271 = vadd.f32 0.0, %v270
    %v272 = vpop.f32.mrb[0].mxu0
    %v273 = vpop.f32.mrb[0].mxu0
    %v274 = vadd.f32 0.0, %v273
    %v275 = vpop.f32.mrb[0].mxu0
    %276 = vmatprep.mubr.bf16.mxu0 0
    %277 = vmatmul.mubr.bf16.gmra.mrb[0].mxu0 %v177
    %v278 = vpop.f32.mrb[0].mxu0
    %v279 = vadd.f32 0.0, %v278
    %v280 = vpop.f32.mrb[0].mxu0
    %v281 = vpop.f32.mrb[0].mxu0
    %v282 = vadd.f32 0.0, %v281
    %v283 = vpop.f32.mrb[0].mxu0
    %284 = vmatprep.mubr.bf16.mxu0 0
    %285 = vmatmul.mubr.bf16.gmra.mrb[0].mxu0 %v180
    %v286 = vpop.f32.mrb[0].mxu0
    %v287 = vadd.f32 0.0, %v286
    %v288 = vpop.f32.mrb[0].mxu0
    %v289 = vpop.f32.mrb[0].mxu0
    %v290 = vadd.f32 0.0, %v289
    %v291 = vpop.f32.mrb[0].mxu0
    %292 = vmatprep.mubr.bf16.mxu0 0
    %293 = vmatmul.mubr.bf16.gmra.mrb[0].mxu0 %v183
    %v294 = vpop.f32.mrb[0].mxu0
    %v295 = vadd.f32 0.0, %v294
    %v296 = vpop.f32.mrb[0].mxu0
    %v297 = vpop.f32.mrb[0].mxu0
    %v298 = vadd.f32 0.0, %v297
    %v299 = vpop.f32.mrb[0].mxu0
    %300 = vmatprep.mubr.bf16.mxu0 0
    %301 = vmatmul.mubr.bf16.gmra.mrb[0].mxu0 %v186
    %v302 = vpop.f32.mrb[0].mxu0
    %v303 = vadd.f32 0.0, %v302
    %v304 = vpop.f32.mrb[0].mxu0
    %v305 = vpop.f32.mrb[0].mxu0
    %v306 = vadd.f32 0.0, %v305
    %v307 = vpop.f32.mrb[0].mxu0
    %308 = vmatprep.mubr.bf16.mxu0 0
    %309 = vmatmul.mubr.bf16.gmra.mrb[0].mxu0 %v189
    %v310 = vpop.f32.mrb[0].mxu0
    %v311 = vadd.f32 0.0, %v310
    %v312 = vpop.f32.mrb[0].mxu0
    %v313 = vpop.f32.mrb[0].mxu0
    %v314 = vadd.f32 0.0, %v313
    %v315 = vpop.f32.mrb[0].mxu0
    %316 = vmatprep.mubr.bf16.mxu0 0
    %317 = vmatmul.mubr.bf16.gmra.mrb[0].mxu0 %v192
    %v318 = vpop.f32.mrb[0].mxu0
    %v319 = vadd.f32 0.0, %v318
    %v320 = vpop.f32.mrb[0].mxu0
    %v321 = vpop.f32.mrb[0].mxu0
    %v322 = vadd.f32 0.0, %v321
    %v323 = vpop.f32.mrb[0].mxu0
    %324 = vmatprep.mubr.bf16.mxu0 0
    %325 = vmatmul.mubr.bf16.gmra.mrb[0].mxu0 %v195
    %v326 = vpop.f32.mrb[0].mxu0
    %v327 = vadd.f32 0.0, %v326
    %v328 = vpop.f32.mrb[0].mxu0
    %v329 = vpop.f32.mrb[0].mxu0
    %v330 = vadd.f32 0.0, %v329
    %v331 = vpop.f32.mrb[0].mxu0
    %332 = vmatprep.mubr.bf16.mxu0 0
    %333 = vmatmul.mubr.bf16.gmra.mrb[0].mxu0 %v198
    %v334 = vpop.f32.mrb[0].mxu0
    %v335 = vadd.f32 0.0, %v334
    %v336 = vpop.f32.mrb[0].mxu0
    %v337 = vpop.f32.mrb[0].mxu0
    %v338 = vadd.f32 0.0, %v337
    %v339 = vpop.f32.mrb[0].mxu0
    %340 = vmatprep.mubr.bf16.mxu0 0
    %341 = vmatmul.mubr.bf16.gmra.mrb[0].mxu0 %v201
    %v342 = vpop.f32.mrb[0].mxu0
    %v343 = vadd.f32 0.0, %v342
    %v344 = vpop.f32.mrb[0].mxu0
    %v345 = vpop.f32.mrb[0].mxu0
    %v346 = vadd.f32 0.0, %v345
    %v347 = vpop.f32.mrb[0].mxu0
    %348 = vmatprep.mubr.bf16.mxu0 0
    %349 = vmatmul.mubr.bf16.gmra.mrb[0].mxu0 %v204
    %v350 = vpop.f32.mrb[0].mxu0
    %v351 = vadd.f32 0.0, %v350
    %v352 = vpop.f32.mrb[0].mxu0
    %v353 = vpop.f32.mrb[0].mxu0
    %v354 = vadd.f32 0.0, %v353
    %v355 = vpop.f32.mrb[0].mxu0
    %356 = vmatprep.mubr.bf16.mxu0 0
    %357 = vmatmul.mubr.bf16.gmra.mrb[0].mxu0 %v207
    %v358 = vpop.f32.mrb[0].mxu0
    %v359 = vadd.f32 0.0, %v358
    %v360 = vpop.f32.mrb[0].mxu0
    %v361 = vpop.f32.mrb[0].mxu0
    %v362 = vadd.f32 0.0, %v361
    %v363 = vpop.f32.mrb[0].mxu0
    %364 = vmatprep.mubr.bf16.mxu0 0
    %365 = vmatmul.mubr.bf16.gmra.mrb[0].mxu0 %v210
    %v366 = vpop.f32.mrb[0].mxu0
    %v367 = vadd.f32 0.0, %v366
    %v368 = vpop.f32.mrb[0].mxu0
    %v369 = vpop.f32.mrb[0].mxu0
    %v370 = vadd.f32 0.0, %v369
    %v371 = vpop.f32.mrb[0].mxu0
    %372 = vdwg.mxu0
    %v373 = vpack.c.bf16 %v250, %v247
    %v374 = vpack.c.bf16 %v258, %v255
    %v375 = vpack.c.bf16 %v266, %v263
    %v376 = vpack.c.bf16 %v274, %v271
    %v377 = vpack.c.bf16 %v282, %v279
    %v378 = vpack.c.bf16 %v290, %v287
    %v379 = vpack.c.bf16 %v298, %v295
    %v380 = vpack.c.bf16 %v306, %v303
    %v381 = vpack.c.bf16 %v314, %v311
    %v382 = vpack.c.bf16 %v322, %v319
    %v383 = vpack.c.bf16 %v330, %v327
    %v384 = vpack.c.bf16 %v338, %v335
    %v385 = vpack.c.bf16 %v346, %v343
    %v386 = vpack.c.bf16 %v354, %v351
    %v387 = vpack.c.bf16 %v362, %v359
    %v388 = vpack.c.bf16 %v370, %v367
    %v389 = vld [vmem:[%s2] sm:$0xf]
    %v390 = vld [vmem:[%s2 + $0x4] sm:$0xf]
    %v391 = vld [vmem:[%s2 + $0x8] sm:$0xf]
    %v392 = vld [vmem:[%s2 + $0xc] sm:$0xf]
    %v393 = vld [vmem:[%s2 + $0x10] sm:$0xf]
    %v394 = vld [vmem:[%s2 + $0x14] sm:$0xf]
    %v395 = vld [vmem:[%s2 + $0x18] sm:$0xf]
    %v396 = vld [vmem:[%s2 + $0x1c] sm:$0xf]
    %v397 = vld [vmem:[%s2 + $0x20] sm:$0xf]
    %v398 = vld [vmem:[%s2 + $0x24] sm:$0xf]
    %v399 = vld [vmem:[%s2 + $0x28] sm:$0xf]
    %v400 = vld [vmem:[%s2 + $0x2c] sm:$0xf]
    %v401 = vld [vmem:[%s2 + $0x30] sm:$0xf]
    %v402 = vld [vmem:[%s2 + $0x34] sm:$0xf]
    %v403 = vld [vmem:[%s2 + $0x38] sm:$0xf]
    %v404 = vld [vmem:[%s2 + $0x3c] sm:$0xf]
    %v405 = vld [vmem:[%s2 + $0x40] sm:$0xf]
    %v406 = vld [vmem:[%s2 + $0x44] sm:$0xf]
    %v407 = vld [vmem:[%s2 + $0x48] sm:$0xf]
    %v408 = vld [vmem:[%s2 + $0x4c] sm:$0xf]
    %v409 = vld [vmem:[%s2 + $0x50] sm:$0xf]
    %v410 = vld [vmem:[%s2 + $0x54] sm:$0xf]
    %v411 = vld [vmem:[%s2 + $0x58] sm:$0xf]
    %v412 = vld [vmem:[%s2 + $0x5c] sm:$0xf]
    %v413 = vld [vmem:[%s2 + $0x60] sm:$0xf]
    %v414 = vld [vmem:[%s2 + $0x64] sm:$0xf]
    %v415 = vld [vmem:[%s2 + $0x68] sm:$0xf]
    %v416 = vld [vmem:[%s2 + $0x6c] sm:$0xf]
    %v417 = vld [vmem:[%s2 + $0x70] sm:$0xf]
    %v418 = vld [vmem:[%s2 + $0x74] sm:$0xf]
    %v419 = vld [vmem:[%s2 + $0x78] sm:$0xf]
    %v420 = vld [vmem:[%s2 + $0x7c] sm:$0xf]
    %422 = vset.pattern.permute.xlu0 0
    %423 = vperm.xlu0 %422, %v389
    %v424 = vpop.permute.xlu0 %423
    %v427 = vunpack.c.l.s4 839922192
    %v428 = vunpack.c.0.s8 %v427
    %v429 = vlaneseq
    %v430 = vshrl.u32 %v429, 7
    %v431 = vsub.s32 %v428, %v430
    %v432 = vrot.slane %v424, %v431
    %434 = vset.pattern.permute.xlu0 0
    %435 = vperm.xlu0 %434, %v390
    %v436 = vpop.permute.xlu0 %435
    %v439 = vunpack.c.l.s4 839922192
    %v440 = vunpack.c.0.s8 %v439
    %v441 = vlaneseq
    %v442 = vshrl.u32 %v441, 7
    %v443 = vsub.s32 %v440, %v442
    %v444 = vrot.slane %v436, %v443
    %446 = vset.pattern.permute.xlu0 0
    %447 = vperm.xlu0 %446, %v391
    %v448 = vpop.permute.xlu0 %447
    %v451 = vunpack.c.l.s4 839922192
    %v452 = vunpack.c.0.s8 %v451
    %v453 = vlaneseq
    %v454 = vshrl.u32 %v453, 7
    %v455 = vsub.s32 %v452, %v454
    %v456 = vrot.slane %v448, %v455
    %458 = vset.pattern.permute.xlu0 0
    %459 = vperm.xlu0 %458, %v392
    %v460 = vpop.permute.xlu0 %459
    %v463 = vunpack.c.l.s4 839922192
    %v464 = vunpack.c.0.s8 %v463
    %v465 = vlaneseq
    %v466 = vshrl.u32 %v465, 7
    %v467 = vsub.s32 %v464, %v466
    %v468 = vrot.slane %v460, %v467
    %470 = vset.pattern.permute.xlu0 0
    %471 = vperm.xlu0 %470, %v393
    %v472 = vpop.permute.xlu0 %471
    %v475 = vunpack.c.l.s4 839922192
    %v476 = vunpack.c.0.s8 %v475
    %v477 = vlaneseq
    %v478 = vshrl.u32 %v477, 7
    %v479 = vsub.s32 %v476, %v478
    %v480 = vrot.slane %v472, %v479
    %482 = vset.pattern.permute.xlu0 0
    %483 = vperm.xlu0 %482, %v394
    %v484 = vpop.permute.xlu0 %483
    %v487 = vunpack.c.l.s4 839922192
    %v488 = vunpack.c.0.s8 %v487
    %v489 = vlaneseq
    %v490 = vshrl.u32 %v489, 7
    %v491 = vsub.s32 %v488, %v490
    %v492 = vrot.slane %v484, %v491
    %494 = vset.pattern.permute.xlu0 0
    %495 = vperm.xlu0 %494, %v395
    %v496 = vpop.permute.xlu0 %495
    %v499 = vunpack.c.l.s4 839922192
    %v500 = vunpack.c.0.s8 %v499
    %v501 = vlaneseq
    %v502 = vshrl.u32 %v501, 7
    %v503 = vsub.s32 %v500, %v502
    %v504 = vrot.slane %v496, %v503
    %506 = vset.pattern.permute.xlu0 0
    %507 = vperm.xlu0 %506, %v396
    %v508 = vpop.permute.xlu0 %507
    %v511 = vunpack.c.l.s4 839922192
    %v512 = vunpack.c.0.s8 %v511
    %v513 = vlaneseq
    %v514 = vshrl.u32 %v513, 7
    %v515 = vsub.s32 %v512, %v514
    %v516 = vrot.slane %v508, %v515
    %518 = vset.pattern.permute.xlu0 0
    %519 = vperm.xlu0 %518, %v397
    %v520 = vpop.permute.xlu0 %519
    %v523 = vunpack.c.l.s4 839922192
    %v524 = vunpack.c.0.s8 %v523
    %v525 = vlaneseq
    %v526 = vshrl.u32 %v525, 7
    %v527 = vsub.s32 %v524, %v526
    %v528 = vrot.slane %v520, %v527
    %530 = vset.pattern.permute.xlu0 0
    %531 = vperm.xlu0 %530, %v398
    %v532 = vpop.permute.xlu0 %531
    %v535 = vunpack.c.l.s4 839922192
    %v536 = vunpack.c.0.s8 %v535
    %v537 = vlaneseq
    %v538 = vshrl.u32 %v537, 7
    %v539 = vsub.s32 %v536, %v538
    %v540 = vrot.slane %v532, %v539
    %542 = vset.pattern.permute.xlu0 0
    %543 = vperm.xlu0 %542, %v399
    %v544 = vpop.permute.xlu0 %543
    %v547 = vunpack.c.l.s4 839922192
    %v548 = vunpack.c.0.s8 %v547
    %v549 = vlaneseq
    %v550 = vshrl.u32 %v549, 7
    %v551 = vsub.s32 %v548, %v550
    %v552 = vrot.slane %v544, %v551
    %554 = vset.pattern.permute.xlu0 0
    %555 = vperm.xlu0 %554, %v400
    %v556 = vpop.permute.xlu0 %555
    %v559 = vunpack.c.l.s4 839922192
    %v560 = vunpack.c.0.s8 %v559
    %v561 = vlaneseq
    %v562 = vshrl.u32 %v561, 7
    %v563 = vsub.s32 %v560, %v562
    %v564 = vrot.slane %v556, %v563
    %566 = vset.pattern.permute.xlu0 0
    %567 = vperm.xlu0 %566, %v401
    %v568 = vpop.permute.xlu0 %567
    %v571 = vunpack.c.l.s4 839922192
    %v572 = vunpack.c.0.s8 %v571
    %v573 = vlaneseq
    %v574 = vshrl.u32 %v573, 7
    %v575 = vsub.s32 %v572, %v574
    %v576 = vrot.slane %v568, %v575
    %578 = vset.pattern.permute.xlu0 0
    %579 = vperm.xlu0 %578, %v402
    %v580 = vpop.permute.xlu0 %579
    %v583 = vunpack.c.l.s4 839922192
    %v584 = vunpack.c.0.s8 %v583
    %v585 = vlaneseq
    %v586 = vshrl.u32 %v585, 7
    %v587 = vsub.s32 %v584, %v586
    %v588 = vrot.slane %v580, %v587
    %590 = vset.pattern.permute.xlu0 0
    %591 = vperm.xlu0 %590, %v403
    %v592 = vpop.permute.xlu0 %591
    %v595 = vunpack.c.l.s4 839922192
    %v596 = vunpack.c.0.s8 %v595
    %v597 = vlaneseq
    %v598 = vshrl.u32 %v597, 7
    %v599 = vsub.s32 %v596, %v598
    %v600 = vrot.slane %v592, %v599
    %602 = vset.pattern.permute.xlu0 0
    %603 = vperm.xlu0 %602, %v404
    %v604 = vpop.permute.xlu0 %603
    %v607 = vunpack.c.l.s4 839922192
    %v608 = vunpack.c.0.s8 %v607
    %v609 = vlaneseq
    %v610 = vshrl.u32 %v609, 7
    %v611 = vsub.s32 %v608, %v610
    %v612 = vrot.slane %v604, %v611
    %614 = vset.pattern.permute.xlu0 0
    %615 = vperm.xlu0 %614, %v405
    %v616 = vpop.permute.xlu0 %615
    %v619 = vunpack.c.l.s4 839922192
    %v620 = vunpack.c.0.s8 %v619
    %v621 = vlaneseq
    %v622 = vshrl.u32 %v621, 7
    %v623 = vsub.s32 %v620, %v622
    %v624 = vrot.slane %v616, %v623
    %626 = vset.pattern.permute.xlu0 0
    %627 = vperm.xlu0 %626, %v406
    %v628 = vpop.permute.xlu0 %627
    %v631 = vunpack.c.l.s4 839922192
    %v632 = vunpack.c.0.s8 %v631
    %v633 = vlaneseq
    %v634 = vshrl.u32 %v633, 7
    %v635 = vsub.s32 %v632, %v634
    %v636 = vrot.slane %v628, %v635
    %638 = vset.pattern.permute.xlu0 0
    %639 = vperm.xlu0 %638, %v407
    %v640 = vpop.permute.xlu0 %639
    %v643 = vunpack.c.l.s4 839922192
    %v644 = vunpack.c.0.s8 %v643
    %v645 = vlaneseq
    %v646 = vshrl.u32 %v645, 7
    %v647 = vsub.s32 %v644, %v646
    %v648 = vrot.slane %v640, %v647
    %650 = vset.pattern.permute.xlu0 0
    %651 = vperm.xlu0 %650, %v408
    %v652 = vpop.permute.xlu0 %651
    %v655 = vunpack.c.l.s4 839922192
    %v656 = vunpack.c.0.s8 %v655
    %v657 = vlaneseq
    %v658 = vshrl.u32 %v657, 7
    %v659 = vsub.s32 %v656, %v658
    %v660 = vrot.slane %v652, %v659
    %662 = vset.pattern.permute.xlu0 0
    %663 = vperm.xlu0 %662, %v409
    %v664 = vpop.permute.xlu0 %663
    %v667 = vunpack.c.l.s4 839922192
    %v668 = vunpack.c.0.s8 %v667
    %v669 = vlaneseq
    %v670 = vshrl.u32 %v669, 7
    %v671 = vsub.s32 %v668, %v670
    %v672 = vrot.slane %v664, %v671
    %674 = vset.pattern.permute.xlu0 0
    %675 = vperm.xlu0 %674, %v410
    %v676 = vpop.permute.xlu0 %675
    %v679 = vunpack.c.l.s4 839922192
    %v680 = vunpack.c.0.s8 %v679
    %v681 = vlaneseq
    %v682 = vshrl.u32 %v681, 7
    %v683 = vsub.s32 %v680, %v682
    %v684 = vrot.slane %v676, %v683
    %686 = vset.pattern.permute.xlu0 0
    %687 = vperm.xlu0 %686, %v411
    %v688 = vpop.permute.xlu0 %687
    %v691 = vunpack.c.l.s4 839922192
    %v692 = vunpack.c.0.s8 %v691
    %v693 = vlaneseq
    %v694 = vshrl.u32 %v693, 7
    %v695 = vsub.s32 %v692, %v694
    %v696 = vrot.slane %v688, %v695
    %698 = vset.pattern.permute.xlu0 0
    %699 = vperm.xlu0 %698, %v412
    %v700 = vpop.permute.xlu0 %699
    %v703 = vunpack.c.l.s4 839922192
    %v704 = vunpack.c.0.s8 %v703
    %v705 = vlaneseq
    %v706 = vshrl.u32 %v705, 7
    %v707 = vsub.s32 %v704, %v706
    %v708 = vrot.slane %v700, %v707
    %710 = vset.pattern.permute.xlu0 0
    %711 = vperm.xlu0 %710, %v413
    %v712 = vpop.permute.xlu0 %711
    %v715 = vunpack.c.l.s4 839922192
    %v716 = vunpack.c.0.s8 %v715
    %v717 = vlaneseq
    %v718 = vshrl.u32 %v717, 7
    %v719 = vsub.s32 %v716, %v718
    %v720 = vrot.slane %v712, %v719
    %722 = vset.pattern.permute.xlu0 0
    %723 = vperm.xlu0 %722, %v414
    %v724 = vpop.permute.xlu0 %723
    %v727 = vunpack.c.l.s4 839922192
    %v728 = vunpack.c.0.s8 %v727
    %v729 = vlaneseq
    %v730 = vshrl.u32 %v729, 7
    %v731 = vsub.s32 %v728, %v730
    %v732 = vrot.slane %v724, %v731
    %734 = vset.pattern.permute.xlu0 0
    %735 = vperm.xlu0 %734, %v415
    %v736 = vpop.permute.xlu0 %735
    %v739 = vunpack.c.l.s4 839922192
    %v740 = vunpack.c.0.s8 %v739
    %v741 = vlaneseq
    %v742 = vshrl.u32 %v741, 7
    %v743 = vsub.s32 %v740, %v742
    %v744 = vrot.slane %v736, %v743
    %746 = vset.pattern.permute.xlu0 0
    %747 = vperm.xlu0 %746, %v416
    %v748 = vpop.permute.xlu0 %747
    %v751 = vunpack.c.l.s4 839922192
    %v752 = vunpack.c.0.s8 %v751
    %v753 = vlaneseq
    %v754 = vshrl.u32 %v753, 7
    %v755 = vsub.s32 %v752, %v754
    %v756 = vrot.slane %v748, %v755
    %758 = vset.pattern.permute.xlu0 0
    %759 = vperm.xlu0 %758, %v417
    %v760 = vpop.permute.xlu0 %759
    %v763 = vunpack.c.l.s4 839922192
    %v764 = vunpack.c.0.s8 %v763
    %v765 = vlaneseq
    %v766 = vshrl.u32 %v765, 7
    %v767 = vsub.s32 %v764, %v766
    %v768 = vrot.slane %v760, %v767
    %770 = vset.pattern.permute.xlu0 0
    %771 = vperm.xlu0 %770, %v418
    %v772 = vpop.permute.xlu0 %771
    %v775 = vunpack.c.l.s4 839922192
    %v776 = vunpack.c.0.s8 %v775
    %v777 = vlaneseq
    %v778 = vshrl.u32 %v777, 7
    %v779 = vsub.s32 %v776, %v778
    %v780 = vrot.slane %v772, %v779
    %782 = vset.pattern.permute.xlu0 0
    %783 = vperm.xlu0 %782, %v419
    %v784 = vpop.permute.xlu0 %783
    %v787 = vunpack.c.l.s4 839922192
    %v788 = vunpack.c.0.s8 %v787
    %v789 = vlaneseq
    %v790 = vshrl.u32 %v789, 7
    %v791 = vsub.s32 %v788, %v790
    %v792 = vrot.slane %v784, %v791
    %794 = vset.pattern.permute.xlu0 0
    %795 = vperm.xlu0 %794, %v420
    %v796 = vpop.permute.xlu0 %795
    %v799 = vunpack.c.l.s4 839922192
    %v800 = vunpack.c.0.s8 %v799
    %v801 = vlaneseq
    %v802 = vshrl.u32 %v801, 7
    %v803 = vsub.s32 %v800, %v802
    %v804 = vrot.slane %v796, %v803
    %v837 = vunpack.c.l.b16 %v432
    %v838 = vunpack.c.l.b16 %v444
    %v839 = vunpack.c.l.b16 %v456
    %v840 = vunpack.c.l.b16 %v468
    %v841 = vunpack.c.l.b16 %v480
    %v842 = vunpack.c.l.b16 %v492
    %v843 = vunpack.c.l.b16 %v504
    %v844 = vunpack.c.l.b16 %v516
    %v845 = vunpack.c.l.b16 %v528
    %v846 = vunpack.c.l.b16 %v540
    %v847 = vunpack.c.l.b16 %v552
    %v848 = vunpack.c.l.b16 %v564
    %v849 = vunpack.c.l.b16 %v576
    %v850 = vunpack.c.l.b16 %v588
    %v851 = vunpack.c.l.b16 %v600
    %v852 = vunpack.c.l.b16 %v612
    %v853 = vunpack.c.l.b16 %v624
    %v854 = vunpack.c.l.b16 %v636
    %v855 = vunpack.c.l.b16 %v648
    %v856 = vunpack.c.l.b16 %v660
    %v857 = vunpack.c.l.b16 %v672
    %v858 = vunpack.c.l.b16 %v684
    %v859 = vunpack.c.l.b16 %v696
    %v860 = vunpack.c.l.b16 %v708
    %v861 = vunpack.c.l.b16 %v720
    %v862 = vunpack.c.l.b16 %v732
    %v863 = vunpack.c.l.b16 %v744
    %v864 = vunpack.c.l.b16 %v756
    %v865 = vunpack.c.l.b16 %v768
    %v866 = vunpack.c.l.b16 %v780
    %v867 = vunpack.c.l.b16 %v792
    %v868 = vunpack.c.l.b16 %v804
    %v869 = vpack.c.b16 %v838, %v837
    %v870 = vpack.c.b16 %v840, %v839
    %v871 = vpack.c.b16 %v842, %v841
    %v872 = vpack.c.b16 %v844, %v843
    %v873 = vpack.c.b16 %v846, %v845
    %v874 = vpack.c.b16 %v848, %v847
    %v875 = vpack.c.b16 %v850, %v849
    %v876 = vpack.c.b16 %v852, %v851
    %v877 = vpack.c.b16 %v854, %v853
    %v878 = vpack.c.b16 %v856, %v855
    %v879 = vpack.c.b16 %v858, %v857
    %v880 = vpack.c.b16 %v860, %v859
    %v881 = vpack.c.b16 %v862, %v861
    %v882 = vpack.c.b16 %v864, %v863
    %v883 = vpack.c.b16 %v866, %v865
    %v884 = vpack.c.b16 %v868, %v867
    %v901 = vadd.bf16 %v373, %v869
    %v902 = vadd.bf16 %v374, %v870
    %v903 = vadd.bf16 %v375, %v871
    %v904 = vadd.bf16 %v376, %v872
    %v905 = vadd.bf16 %v377, %v873
    %v906 = vadd.bf16 %v378, %v874
    %v907 = vadd.bf16 %v379, %v875
    %v908 = vadd.bf16 %v380, %v876
    %v909 = vadd.bf16 %v381, %v877
    %v910 = vadd.bf16 %v382, %v878
    %v911 = vadd.bf16 %v383, %v879
    %v912 = vadd.bf16 %v384, %v880
    %v913 = vadd.bf16 %v385, %v881
    %v914 = vadd.bf16 %v386, %v882
    %v915 = vadd.bf16 %v387, %v883
    %v916 = vadd.bf16 %v388, %v884
    %vm917 = vcmp.ge.bf16.partialorder %v901, 0
    %vm918 = vcmp.ge.bf16.partialorder %v902, 0
    %vm919 = vcmp.ge.bf16.partialorder %v903, 0
    %vm920 = vcmp.ge.bf16.partialorder %v904, 0
    %vm921 = vcmp.ge.bf16.partialorder %v905, 0
    %vm922 = vcmp.ge.bf16.partialorder %v906, 0
    %vm923 = vcmp.ge.bf16.partialorder %v907, 0
    %vm924 = vcmp.ge.bf16.partialorder %v908, 0
    %vm925 = vcmp.ge.bf16.partialorder %v909, 0
    %vm926 = vcmp.ge.bf16.partialorder %v910, 0
    %vm927 = vcmp.ge.bf16.partialorder %v911, 0
    %vm928 = vcmp.ge.bf16.partialorder %v912, 0
    %vm929 = vcmp.ge.bf16.partialorder %v913, 0
    %vm930 = vcmp.ge.bf16.partialorder %v914, 0
    %vm931 = vcmp.ge.bf16.partialorder %v915, 0
    %vm932 = vcmp.ge.bf16.partialorder %v916, 0
    %v933 = vmul.bf16 %v901, 1009007652
    %v934 = vmul.bf16 %v902, 1009007652
    %v935 = vmul.bf16 %v903, 1009007652
    %v936 = vmul.bf16 %v904, 1009007652
    %v937 = vmul.bf16 %v905, 1009007652
    %v938 = vmul.bf16 %v906, 1009007652
    %v939 = vmul.bf16 %v907, 1009007652
    %v940 = vmul.bf16 %v908, 1009007652
    %v941 = vmul.bf16 %v909, 1009007652
    %v942 = vmul.bf16 %v910, 1009007652
    %v943 = vmul.bf16 %v911, 1009007652
    %v944 = vmul.bf16 %v912, 1009007652
    %v945 = vmul.bf16 %v913, 1009007652
    %v946 = vmul.bf16 %v914, 1009007652
    %v947 = vmul.bf16 %v915, 1009007652
    %v948 = vmul.bf16 %v916, 1009007652
    %v949 = vsel %vm917, %v901, %v933
    %v950 = vsel %vm918, %v902, %v934
    %v951 = vsel %vm919, %v903, %v935
    %v952 = vsel %vm920, %v904, %v936
    %v953 = vsel %vm921, %v905, %v937
    %v954 = vsel %vm922, %v906, %v938
    %v955 = vsel %vm923, %v907, %v939
    %v956 = vsel %vm924, %v908, %v940
    %v957 = vsel %vm925, %v909, %v941
    %v958 = vsel %vm926, %v910, %v942
    %v959 = vsel %vm927, %v911, %v943
    %v960 = vsel %vm928, %v912, %v944
    %v961 = vsel %vm929, %v913, %v945
    %v962 = vsel %vm930, %v914, %v946
    %v963 = vsel %vm931, %v915, %v947
    %v964 = vsel %vm932, %v916, %v948
    %v965 = vld [vmem:[%s3] sm:$0xff]
    %v966 = vld [vmem:[%s3 + $0x8] sm:$0xff]
    %v967 = vld [vmem:[%s3 + $0x10] sm:$0xff]
    %v968 = vld [vmem:[%s3 + $0x18] sm:$0xff]
    %v969 = vld [vmem:[%s3 + $0x20] sm:$0xff]
    %v970 = vld [vmem:[%s3 + $0x28] sm:$0xff]
    %v971 = vld [vmem:[%s3 + $0x30] sm:$0xff]
    %v972 = vld [vmem:[%s3 + $0x38] sm:$0xff]
    %v981 = vunpack.c.l.b16 %v965
    %v982 = vunpack.c.h.b16 %v965
    %v983 = vunpack.c.l.b16 %v966
    %v984 = vunpack.c.h.b16 %v966
    %v985 = vunpack.c.l.b16 %v967
    %v986 = vunpack.c.h.b16 %v967
    %v987 = vunpack.c.l.b16 %v968
    %v988 = vunpack.c.h.b16 %v968
    %v989 = vunpack.c.l.b16 %v969
    %v990 = vunpack.c.h.b16 %v969
    %v991 = vunpack.c.l.b16 %v970
    %v992 = vunpack.c.h.b16 %v970
    %v993 = vunpack.c.l.b16 %v971
    %v994 = vunpack.c.h.b16 %v971
    %v995 = vunpack.c.l.b16 %v972
    %v996 = vunpack.c.h.b16 %v972
    %v997 = vpack.c.b16 %v983, %v981
    %v998 = vpack.c.b16 %v984, %v982
    %v999 = vpack.c.b16 %v987, %v985
    %v1000 = vpack.c.b16 %v988, %v986
    %v1001 = vpack.c.b16 %v991, %v989
    %v1002 = vpack.c.b16 %v992, %v990
    %v1003 = vpack.c.b16 %v995, %v993
    %v1004 = vpack.c.b16 %v996, %v994
    %1013 = vmatprep.subr.bf16.mxu0 0
    %1014 = vmatpush1.bf16.msra.mxu0 %v949
    %1015 = vmatprep.subr.bf16.mxu0 0
    %1016 = vmatpush1.bf16.msra.mxu0 %v950
    %1017 = vmatprep.subr.bf16.mxu0 0
    %1018 = vmatpush1.bf16.msra.mxu0 %v951
    %1019 = vmatprep.subr.bf16.mxu0 0
    %1020 = vmatpush1.bf16.msra.mxu0 %v952
    %1021 = vmatprep.subr.bf16.mxu0 0
    %1022 = vmatpush1.bf16.msra.mxu0 %v953
    %1023 = vmatprep.subr.bf16.mxu0 0
    %1024 = vmatpush1.bf16.msra.mxu0 %v954
    %1025 = vmatprep.subr.bf16.mxu0 0
    %1026 = vmatpush1.bf16.msra.mxu0 %v955
    %1027 = vmatprep.subr.bf16.mxu0 0
    %1028 = vmatpush1.bf16.msra.mxu0 %v956
    %1029 = vmatprep.subr.bf16.mxu0 0
    %1030 = vmatpush1.bf16.msra.mxu0 %v957
    %1031 = vmatprep.subr.bf16.mxu0 0
    %1032 = vmatpush1.bf16.msra.mxu0 %v958
    %1033 = vmatprep.subr.bf16.mxu0 0
    %1034 = vmatpush1.bf16.msra.mxu0 %v959
    %1035 = vmatprep.subr.bf16.mxu0 0
    %1036 = vmatpush1.bf16.msra.mxu0 %v960
    %1037 = vmatprep.subr.bf16.mxu0 0
    %1038 = vmatpush1.bf16.msra.mxu0 %v961
    %1039 = vmatprep.subr.bf16.mxu0 0
    %1040 = vmatpush1.bf16.msra.mxu0 %v962
    %1041 = vmatprep.subr.bf16.mxu0 0
    %1042 = vmatpush1.bf16.msra.mxu0 %v963
    %1043 = vmatprep.subr.bf16.mxu0 0
    %1044 = vmatpush1.bf16.msra.mxu0 %v964
    %1045 = vmatprep.mubr.bf16.mxu0 %v998
    %1046 = vmatmul.mubr.bf16.gmra.mrb[0].mxu0 %v997
    %v1047 = vpop.f32.mrb[0].mxu0
    %v1048 = vadd.f32 0.0, %v1047
    %v1049 = vpop.f32.mrb[0].mxu0
    %v1050 = vpop.f32.mrb[0].mxu0
    %v1051 = vadd.f32 0.0, %v1050
    %v1052 = vpop.f32.mrb[0].mxu0
    %1053 = vmatprep.mubr.bf16.mxu0 %v1000
    %1054 = vmatmul.mubr.bf16.gmra.mrb[0].mxu0 %v999
    %v1055 = vpop.f32.mrb[0].mxu0
    %v1056 = vadd.f32 0.0, %v1055
    %v1057 = vpop.f32.mrb[0].mxu0
    %v1058 = vpop.f32.mrb[0].mxu0
    %v1059 = vadd.f32 0.0, %v1058
    %v1060 = vpop.f32.mrb[0].mxu0
    %1061 = vmatprep.mubr.bf16.mxu0 %v1002
    %1062 = vmatmul.mubr.bf16.gmra.mrb[0].mxu0 %v1001
    %v1063 = vpop.f32.mrb[0].mxu0
    %v1064 = vadd.f32 0.0, %v1063
    %v1065 = vpop.f32.mrb[0].mxu0
    %v1066 = vpop.f32.mrb[0].mxu0
    %v1067 = vadd.f32 0.0, %v1066
    %v1068 = vpop.f32.mrb[0].mxu0
    %1069 = vmatprep.mubr.bf16.mxu0 %v1004
    %1070 = vmatmul.mubr.bf16.gmra.mrb[0].mxu0 %v1003
    %v1071 = vpop.f32.mrb[0].mxu0
    %v1072 = vadd.f32 0.0, %v1071
    %v1073 = vpop.f32.mrb[0].mxu0
    %v1074 = vpop.f32.mrb[0].mxu0
    %v1075 = vadd.f32 0.0, %v1074
    %v1076 = vpop.f32.mrb[0].mxu0
    %1077 = vdwg.mxu0
    %v1078 = vpack.c.bf16 %v1051, %v1048
    %v1079 = vpack.c.bf16 %v1059, %v1056
    %v1080 = vpack.c.bf16 %v1067, %v1064
    %v1081 = vpack.c.bf16 %v1075, %v1072
    %v1082 = vld [vmem:[%s4] sm:$0xf]
    %v1083 = vld [vmem:[%s4 + $0x4] sm:$0xf]
    %v1084 = vld [vmem:[%s4 + $0x8] sm:$0xf]
    %v1085 = vld [vmem:[%s4 + $0xc] sm:$0xf]
    %v1086 = vld [vmem:[%s4 + $0x10] sm:$0xf]
    %v1087 = vld [vmem:[%s4 + $0x14] sm:$0xf]
    %v1088 = vld [vmem:[%s4 + $0x18] sm:$0xf]
    %v1089 = vld [vmem:[%s4 + $0x1c] sm:$0xf]
    %1091 = vset.pattern.permute.xlu0 0
    %1092 = vperm.xlu0 %1091, %v1082
    %v1093 = vpop.permute.xlu0 %1092
    %v1096 = vunpack.c.l.s4 839922192
    %v1097 = vunpack.c.0.s8 %v1096
    %v1098 = vlaneseq
    %v1099 = vshrl.u32 %v1098, 7
    %v1100 = vsub.s32 %v1097, %v1099
    %v1101 = vrot.slane %v1093, %v1100
    %1103 = vset.pattern.permute.xlu0 0
    %1104 = vperm.xlu0 %1103, %v1083
    %v1105 = vpop.permute.xlu0 %1104
    %v1108 = vunpack.c.l.s4 839922192
    %v1109 = vunpack.c.0.s8 %v1108
    %v1110 = vlaneseq
    %v1111 = vshrl.u32 %v1110, 7
    %v1112 = vsub.s32 %v1109, %v1111
    %v1113 = vrot.slane %v1105, %v1112
    %1115 = vset.pattern.permute.xlu0 0
    %1116 = vperm.xlu0 %1115, %v1084
    %v1117 = vpop.permute.xlu0 %1116
    %v1120 = vunpack.c.l.s4 839922192
    %v1121 = vunpack.c.0.s8 %v1120
    %v1122 = vlaneseq
    %v1123 = vshrl.u32 %v1122, 7
    %v1124 = vsub.s32 %v1121, %v1123
    %v1125 = vrot.slane %v1117, %v1124
    %1127 = vset.pattern.permute.xlu0 0
    %1128 = vperm.xlu0 %1127, %v1085
    %v1129 = vpop.permute.xlu0 %1128
    %v1132 = vunpack.c.l.s4 839922192
    %v1133 = vunpack.c.0.s8 %v1132
    %v1134 = vlaneseq
    %v1135 = vshrl.u32 %v1134, 7
    %v1136 = vsub.s32 %v1133, %v1135
    %v1137 = vrot.slane %v1129, %v1136
    %1139 = vset.pattern.permute.xlu0 0
    %1140 = vperm.xlu0 %1139, %v1086
    %v1141 = vpop.permute.xlu0 %1140
    %v1144 = vunpack.c.l.s4 839922192
    %v1145 = vunpack.c.0.s8 %v1144
    %v1146 = vlaneseq
    %v1147 = vshrl.u32 %v1146, 7
    %v1148 = vsub.s32 %v1145, %v1147
    %v1149 = vrot.slane %v1141, %v1148
    %1151 = vset.pattern.permute.xlu0 0
    %1152 = vperm.xlu0 %1151, %v1087
    %v1153 = vpop.permute.xlu0 %1152
    %v1156 = vunpack.c.l.s4 839922192
    %v1157 = vunpack.c.0.s8 %v1156
    %v1158 = vlaneseq
    %v1159 = vshrl.u32 %v1158, 7
    %v1160 = vsub.s32 %v1157, %v1159
    %v1161 = vrot.slane %v1153, %v1160
    %1163 = vset.pattern.permute.xlu0 0
    %1164 = vperm.xlu0 %1163, %v1088
    %v1165 = vpop.permute.xlu0 %1164
    %v1168 = vunpack.c.l.s4 839922192
    %v1169 = vunpack.c.0.s8 %v1168
    %v1170 = vlaneseq
    %v1171 = vshrl.u32 %v1170, 7
    %v1172 = vsub.s32 %v1169, %v1171
    %v1173 = vrot.slane %v1165, %v1172
    %1175 = vset.pattern.permute.xlu0 0
    %1176 = vperm.xlu0 %1175, %v1089
    %v1177 = vpop.permute.xlu0 %1176
    %v1180 = vunpack.c.l.s4 839922192
    %v1181 = vunpack.c.0.s8 %v1180
    %v1182 = vlaneseq
    %v1183 = vshrl.u32 %v1182, 7
    %v1184 = vsub.s32 %v1181, %v1183
    %v1185 = vrot.slane %v1177, %v1184
    %v1194 = vunpack.c.l.b16 %v1101
    %v1195 = vunpack.c.l.b16 %v1113
    %v1196 = vunpack.c.l.b16 %v1125
    %v1197 = vunpack.c.l.b16 %v1137
    %v1198 = vunpack.c.l.b16 %v1149
    %v1199 = vunpack.c.l.b16 %v1161
    %v1200 = vunpack.c.l.b16 %v1173
    %v1201 = vunpack.c.l.b16 %v1185
    %v1202 = vpack.c.b16 %v1195, %v1194
    %v1203 = vpack.c.b16 %v1197, %v1196
    %v1204 = vpack.c.b16 %v1199, %v1198
    %v1205 = vpack.c.b16 %v1201, %v1200
    %v1210 = vadd.bf16 %v1078, %v1202
    %v1211 = vadd.bf16 %v1079, %v1203
    %v1212 = vadd.bf16 %v1080, %v1204
    %v1213 = vadd.bf16 %v1081, %v1205
    %vm1214 = vcmp.ge.bf16.partialorder %v1210, 0
    %vm1215 = vcmp.ge.bf16.partialorder %v1211, 0
    %vm1216 = vcmp.ge.bf16.partialorder %v1212, 0
    %vm1217 = vcmp.ge.bf16.partialorder %v1213, 0
    %v1218 = vmul.bf16 %v1210, 1009007652
    %v1219 = vmul.bf16 %v1211, 1009007652
    %v1220 = vmul.bf16 %v1212, 1009007652
    %v1221 = vmul.bf16 %v1213, 1009007652
    %v1222 = vsel %vm1214, %v1210, %v1218
    %v1223 = vsel %vm1215, %v1211, %v1219
    %v1224 = vsel %vm1216, %v1212, %v1220
    %v1225 = vsel %vm1217, %v1213, %v1221
    %v1226 = vld [vmem:[%s5] sm:$0xf]
    %v1227 = vld [vmem:[%s5 + $0x4] sm:$0xf]
    %v1230 = vunpack.c.l.b16 %v1226
    %v1231 = vunpack.c.l.b16 %v1227
    %v1232 = vpack.c.b16 %v1231, %v1230
    %vm1233 = vcmask 523264
    %v1235 = vsel %vm1233, %v1232, 0
    %1237 = vmatprep.subr.bf16.mxu0 0
    %1238 = vmatpush1.bf16.msra.mxu0 %v1222
    %1239 = vmatprep.subr.bf16.mxu0 0
    %1240 = vmatpush1.bf16.msra.mxu0 %v1223
    %1241 = vmatprep.subr.bf16.mxu0 0
    %1242 = vmatpush1.bf16.msra.mxu0 %v1224
    %1243 = vmatprep.subr.bf16.mxu0 0
    %1244 = vmatpush1.bf16.msra.mxu0 %v1225
    %1245 = vmatprep.subr.bf16.mxu0 0
    %1246 = vmatpush1.bf16.msra.mxu0 0
    %1247 = vmatprep.subr.bf16.mxu0 0
    %1248 = vmatpush1.bf16.msra.mxu0 0
    %1249 = vmatprep.subr.bf16.mxu0 0
    %1250 = vmatpush1.bf16.msra.mxu0 0
    %1251 = vmatprep.subr.bf16.mxu0 0
    %1252 = vmatpush1.bf16.msra.mxu0 0
    %1253 = vmatprep.subr.bf16.mxu0 0
    %1254 = vmatpush1.bf16.msra.mxu0 0
    %1255 = vmatprep.subr.bf16.mxu0 0
    %1256 = vmatpush1.bf16.msra.mxu0 0
    %1257 = vmatprep.subr.bf16.mxu0 0
    %1258 = vmatpush1.bf16.msra.mxu0 0
    %1259 = vmatprep.subr.bf16.mxu0 0
    %1260 = vmatpush1.bf16.msra.mxu0 0
    %1261 = vmatprep.subr.bf16.mxu0 0
    %1262 = vmatpush1.bf16.msra.mxu0 0
    %1263 = vmatprep.subr.bf16.mxu0 0
    %1264 = vmatpush1.bf16.msra.mxu0 0
    %1265 = vmatprep.subr.bf16.mxu0 0
    %1266 = vmatpush1.bf16.msra.mxu0 0
    %1267 = vmatprep.subr.bf16.mxu0 0
    %1268 = vmatpush1.bf16.msra.mxu0 0
    %1269 = vmatprep.mubr.bf16.mxu0 0
    %1270 = vmatmul.mubr.bf16.gmra.mrb[0].mxu0 %v1235
    %v1271 = vpop.f32.mrb[0].mxu0
    %v1272 = vadd.f32 0.0, %v1271
    %v1273 = vpop.f32.mrb[0].mxu0
    %v1274 = vpop.f32.mrb[0].mxu0
    %v1275 = vadd.f32 0.0, %v1274
    %v1276 = vpop.f32.mrb[0].mxu0
    %1277 = vdwg.mxu0
    %v1278 = vpack.c.bf16 %v1275, %v1272
    %v1279 = vld [vmem:[%s6] sm:$0xf]
    %v1280 = vld [vmem:[%s6 + $0x4] sm:$0xf]
    %1282 = vset.pattern.permute.xlu0 0
    %1283 = vperm.xlu0 %1282, %v1279
    %v1284 = vpop.permute.xlu0 %1283
    %v1287 = vunpack.c.l.s4 839922192
    %v1288 = vunpack.c.0.s8 %v1287
    %v1289 = vlaneseq
    %v1290 = vshrl.u32 %v1289, 7
    %v1291 = vsub.s32 %v1288, %v1290
    %v1292 = vrot.slane %v1284, %v1291
    %1294 = vset.pattern.permute.xlu0 0
    %1295 = vperm.xlu0 %1294, %v1280
    %v1296 = vpop.permute.xlu0 %1295
    %v1299 = vunpack.c.l.s4 839922192
    %v1300 = vunpack.c.0.s8 %v1299
    %v1301 = vlaneseq
    %v1302 = vshrl.u32 %v1301, 7
    %v1303 = vsub.s32 %v1300, %v1302
    %v1304 = vrot.slane %v1296, %v1303
    %v1307 = vunpack.c.l.b16 %v1292
    %v1308 = vunpack.c.l.b16 %v1304
    %v1309 = vpack.c.b16 %v1308, %v1307
    %v1311 = vadd.bf16 %v1278, %v1309
    %vm1312 = vcmp.ge.bf16.partialorder %v1311, 0
    %v1313 = vmul.bf16 %v1311, 1009007652
    %v1314 = vsel %vm1312, %v1311, %v1313
    %v1315 = vld [vmem:[%s7] sm:$0x1]
    %vm1316 = vcmask 130048
    %v1318 = vsel %vm1316, %v1315, 0
    %1320 = vmatprep.subr.bf16.mxu0 0
    %1321 = vmatpush1.bf16.msra.mxu0 %v1314
    %1322 = vmatprep.subr.bf16.mxu0 0
    %1323 = vmatpush1.bf16.msra.mxu0 0
    %1324 = vmatprep.subr.bf16.mxu0 0
    %1325 = vmatpush1.bf16.msra.mxu0 0
    %1326 = vmatprep.subr.bf16.mxu0 0
    %1327 = vmatpush1.bf16.msra.mxu0 0
    %1328 = vmatprep.subr.bf16.mxu0 0
    %1329 = vmatpush1.bf16.msra.mxu0 0
    %1330 = vmatprep.subr.bf16.mxu0 0
    %1331 = vmatpush1.bf16.msra.mxu0 0
    %1332 = vmatprep.subr.bf16.mxu0 0
    %1333 = vmatpush1.bf16.msra.mxu0 0
    %1334 = vmatprep.subr.bf16.mxu0 0
    %1335 = vmatpush1.bf16.msra.mxu0 0
    %1336 = vmatprep.subr.bf16.mxu0 0
    %1337 = vmatpush1.bf16.msra.mxu0 0
    %1338 = vmatprep.subr.bf16.mxu0 0
    %1339 = vmatpush1.bf16.msra.mxu0 0
    %1340 = vmatprep.subr.bf16.mxu0 0
    %1341 = vmatpush1.bf16.msra.mxu0 0
    %1342 = vmatprep.subr.bf16.mxu0 0
    %1343 = vmatpush1.bf16.msra.mxu0 0
    %1344 = vmatprep.subr.bf16.mxu0 0
    %1345 = vmatpush1.bf16.msra.mxu0 0
    %1346 = vmatprep.subr.bf16.mxu0 0
    %1347 = vmatpush1.bf16.msra.mxu0 0
    %1348 = vmatprep.subr.bf16.mxu0 0
    %1349 = vmatpush1.bf16.msra.mxu0 0
    %1350 = vmatprep.subr.bf16.mxu0 0
    %1351 = vmatpush1.bf16.msra.mxu0 0
    %1352 = vmatprep.mubr.bf16.mxu0 0
    %1353 = vmatmul.mubr.bf16.gmra.mrb[0].mxu0 %v1318
    %v1354 = vpop.f32.mrb[0].mxu0
    %v1355 = vadd.f32 0.0, %v1354
    %v1356 = vpop.f32.mrb[0].mxu0
    %v1357 = vpop.f32.mrb[0].mxu0
    %v1358 = vpop.f32.mrb[0].mxu0
    %1359 = vdwg.mxu0
    %v1360 = vpack.c.bf16 %v1355, %v1355
    %v1361 = vld [vmem:[%s8] sm:$0x1]
    %1363 = vset.pattern.permute.xlu0 0
    %1364 = vperm.xlu0 %1363, %v1361
    %v1365 = vpop.permute.xlu0 %1364
    %v1367 = vlaneseq
    %v1368 = vshrl.u32 %v1367, 7
    %v1369 = vsub.s32 0, %v1368
    %v1370 = vrot.slane %v1365, %v1369
    %v1371 = vadd.bf16 %v1360, %v1370
    %vm1372 = vcmp.ge.bf16.partialorder %v1371, 0
    %v1373 = vmul.bf16 %v1371, 1009007652
    %v1374 = vsel %vm1372, %v1371, %v1373
    %v1375 = vunpack.c.l.bf16 %v1374
    %v1377 = vrot.slane %v1375, 1
    %v1379 = vsub.f32 %v1375, %v1377
    %v1380 = vsub.f32 0.0, %v1379
    %v1381 = vmul.f32 %v1380, 1.442695
    %v1382 = vpow.pop %v1381
    %v1383 = vadd.f32 %v1382, 1.0
    %v1384 = vrcp.pop %v1383
    %v1385 = vsub.f32 1.0, %v1384
    %v1387 = vrot.slane %v1385, 7
    %vm1389 = vcmask 1040384
    %v1390 = vsel %vm1389, %v1384, %v1387
    %1391 = vst [vmem:[#allocation2] sm:$0x3] %v1390
    // Predicated region
    $region38: #{tpu_custom_call.1} parent=1 // pred_check
      _
    $region39: #{tpu_custom_call.1} parent=1 // pred_check_branch
      %1393 = sbr.rel (0) target = $region41
    $region40: #{tpu_custom_call.1} parent=1 // pred_region
      %s1395 = ssub.s32 32, 32
      %1396 = vsyncadd [#allocation3], %s1395
      %s1398 = sshll.u32 [#allocation2], 4
      %s1399 = int_to_ptr.vmem [resolvable:$true] %s1398
      %1401 = dma.vmem_to_hbm [thread:$0]  %s1399, 32, %s9, [#allocation3]
    $region41: #{tpu_custom_call.1} parent=1 // pred_fallthru
      _
    // Predicated region
    $region42: #{tpu_custom_call.1} parent=1 // pred_check
      _
    $region43: #{tpu_custom_call.1} parent=1 // pred_check_branch
      %1403 = sbr.rel (0) target = $region45
    $region44: #{tpu_custom_call.1} parent=1 // pred_region
      %1404 = dma.done [#allocation3], 32
    $region45: #{tpu_custom_call.1} parent=1 // pred_fallthru
      _
    %1405 = vsyncpa [#allocation3], 1

</llo_original>
